<compile_context>
chip_gen: v5e
topology: v5e:2x2
jax: 0.10.0
libtpu: 0.0.40
codegen_flags: <defaults>
</compile_context>

<pallas_src>
import jax
import jax.numpy as jnp
from jax.experimental import pallas as pl
from jax.experimental.pallas import tpu as pltpu


def _round_up(x, m):
    return (x + m - 1) // m * m


# ---------------------------------------------------------------------------
# Path A: VMEM-resident table, blocked one-hot matmul on the MXU.
# ---------------------------------------------------------------------------
def _onehot_matmul_kernel(idx_ref, w_ref, o_ref):
    # idx_ref: (B, 1) int32  -- indices for this row block
    # w_ref:   (W, Vp) f32   -- full weight table, resident in VMEM
    # o_ref:   (B, Vp) f32   -- lane-dense output tile
    idx = idx_ref[...]                                     # (B, 1)
    b, w = idx.shape[0], w_ref.shape[0]
    onehot = (jax.lax.broadcasted_iota(jnp.int32, (b, w), 1) == idx)
    onehot = onehot.astype(w_ref.dtype)                    # (B, W)
    o_ref[...] = jnp.dot(
        onehot, w_ref[...], preferred_element_type=jnp.float32
    ).astype(o_ref.dtype)


def _embedding_resident(idx, weights, block_rows):
    n = idx.shape[0]
    w_size, v_size = weights.shape

    # Lane-dense output: pad the embedding dim to a multiple of 128
    # (zero columns, sliced off after the call).
    v_pad = _round_up(v_size, 128)
    if v_pad != v_size:
        weights = jnp.pad(weights, ((0, 0), (0, v_pad - v_size)))

    # Rows per grid step: sublane multiple (>=8), capped so the (B, W) one-hot
    # intermediate stays around ~1 MiB of VMEM.
    if block_rows is None:
        cap = max(8, ((1 << 20) // (4 * w_size)) // 8 * 8)
        b = min(256, _round_up(n, 8), cap)
    else:
        b = block_rows
    b = max(8, _round_up(b, 8))

    n_pad = _round_up(n, b)
    if n_pad != n:
        idx = jnp.pad(idx, (0, n_pad - n))   # padded rows gather row 0; sliced off
    idx2 = idx.reshape(n_pad, 1)

    out = pl.pallas_call(
        _onehot_matmul_kernel,
        out_shape=jax.ShapeDtypeStruct((n_pad, v_pad), jnp.float32),
        grid_spec=pltpu.PrefetchScalarGridSpec(
            num_scalar_prefetch=0,
            grid=(n_pad // b,),
            in_specs=[
                pl.BlockSpec((b, 1), lambda i: (i, 0)),
                # Same block every step -> fetched from HBM once, kept resident.
                pl.BlockSpec((w_size, v_pad), lambda i: (0, 0)),
            ],
            out_specs=pl.BlockSpec((b, v_pad), lambda i: (i, 0)),
        ),
        compiler_params=pltpu.CompilerParams(
            # Independent row blocks -> shards across the 2 TensorCores on v7x.
            dimension_semantics=("parallel",),
            # Headroom sized against v7x's 64 MiB physical VMEM.
            vmem_limit_bytes=48 * 1024 * 1024,
        ),
        cost_estimate=pl.CostEstimate(
            flops=2 * n_pad * w_size * v_pad,
            transcendentals=0,
            bytes_accessed=(w_size * v_pad + n_pad * v_pad) * 4 + n_pad * 4,
        ),
    )(idx2, weights)

    return out[:n, :v_size]


# ---------------------------------------------------------------------------
# Path B: large table in HBM, batched row gather with manual double-buffered
# DMAs driven by scalar-prefetched indices.
# ---------------------------------------------------------------------------
def _gather_hbm_kernel(idx_ref, w_hbm, o_ref, scratch, sems):
    # idx_ref: (n_pad,) int32 in SMEM (scalar prefetch)
    # w_hbm:   (W, V) f32 in HBM (memory_space=pl.ANY)
    # o_ref:   (B, V) f32 output tile in VMEM
    # scratch: (2, B, V) f32 VMEM double buffer
    # sems:    (2, B) DMA semaphores
    i = pl.program_id(0)
    nb = pl.num_programs(0)
    b = o_ref.shape[0]

    def issue(block, slot):
        base = block * b
        for j in range(b):  # static unroll: B row DMAs in flight at once
            pltpu.make_async_copy(
                w_hbm.at[idx_ref[base + j]],
                scratch.at[slot, j],
                sems.at[slot, j],
            ).start()

    # Prime the pipeline on the first step.
    @pl.when(i == 0)
    def _():
        issue(0, 0)

    slot = i % 2

    # Prefetch the next block's rows into the other buffer.
    @pl.when(i + 1 < nb)
    def _():
        issue(i + 1, 1 - slot)

    # Wait for this block's B row copies.
    for j in range(b):
        pltpu.make_async_copy(
            w_hbm.at[0], scratch.at[slot, j], sems.at[slot, j]
        ).wait()

    o_ref[...] = scratch[slot]


def _embedding_gather_hbm(idx, weights, block_rows):
    n = idx.shape[0]
    w_size, v_size = weights.shape

    b = block_rows if block_rows is not None else min(128, _round_up(n, 8))
    b = max(8, _round_up(b, 8))
    n_pad = _round_up(n, b)
    if n_pad != n:
        idx = jnp.pad(idx, (0, n_pad - n))   # padded rows gather row 0; sliced off

    out = pl.pallas_call(
        _gather_hbm_kernel,
        out_shape=jax.ShapeDtypeStruct((n_pad, v_size), jnp.float32),
        grid_spec=pltpu.PrefetchScalarGridSpec(
            num_scalar_prefetch=1,            # indices -> SMEM
            grid=(n_pad // b,),
            in_specs=[pl.BlockSpec(memory_space=pl.ANY)],   # weights stay in HBM
            out_specs=pl.BlockSpec((b, v_size), lambda i, idx_ref: (i, 0)),
            scratch_shapes=[
                pltpu.VMEM((2, b, v_size), jnp.float32),
                pltpu.SemaphoreType.DMA((2, b)),
            ],
        ),
        compiler_params=pltpu.CompilerParams(
            # Double-buffer state is carried across grid steps -> sequential.
            dimension_semantics=("arbitrary",),
        ),
        cost_estimate=pl.CostEstimate(
            flops=0,
            transcendentals=0,
            bytes_accessed=2 * n_pad * v_size * 4 + n_pad * 4,
        ),
    )(idx, weights)

    return out[:n]


# ---------------------------------------------------------------------------
# Public wrapper: matches EmbeddingOnehot.forward semantics.
# ---------------------------------------------------------------------------
def embedding_onehot(indices, weights, *, block_rows=None,
                     force_hbm_gather=False,
                     vmem_table_budget_bytes=4 * 1024 * 1024):
    """out[i] = weights[indices[i]]  (== one_hot(indices).float() @ weights)."""
    w_size, v_size = weights.shape
    weights = weights.astype(jnp.float32)
    # Out-of-range indices would be an OOB DMA on the HBM path (PyTorch's
    # one_hot raises instead); clamp defensively.
    # TODO(synk): swap the clamp for pl.debug_check if strict validation is wanted.
    idx = jnp.clip(indices.astype(jnp.int32), 0, w_size - 1)

    padded_table_bytes = w_size * _round_up(v_size, 128) * 4
    if (not force_hbm_gather) and padded_table_bytes <= vmem_table_budget_bytes:
        return _embedding_resident(idx, weights, block_rows)
    return _embedding_gather_hbm(idx, weights, block_rows)


if __name__ == "__main__":
    key = jax.random.PRNGKey(0)
    k_w, k_i, k_w2, k_i2 = jax.random.split(key, 4)

    # --- Small config matching the module (exercises the resident-table path).
    word_size, vector_size, n_tokens = 16, 32, 8
    weights = jax.random.normal(k_w, (word_size, vector_size), dtype=jnp.float32)
    indices = jax.random.randint(k_i, (n_tokens,), 0, word_size, dtype=jnp.int32)
    # Ensure max index == word_size - 1 so torch one_hot would infer word_size classes.
    indices = indices.at[0].set(word_size - 1)

    out = jax.block_until_ready(embedding_onehot(indices, weights))
    ref = weights[indices]
    assert out.shape == (n_tokens, vector_size)
    assert jnp.allclose(out, ref, atol=1e-6), "resident-table path mismatch"

    # --- Slightly larger config forcing the HBM double-buffered gather path.
    w2, v2, n2 = 512, 256, 40
    weights2 = jax.random.normal(k_w2, (w2, v2), dtype=jnp.float32)
    indices2 = jax.random.randint(k_i2, (n2,), 0, w2, dtype=jnp.int32)

    out2 = jax.block_until_ready(
        embedding_onehot(indices2, weights2, block_rows=16, force_hbm_gather=True))
    ref2 = weights2[indices2]
    assert out2.shape == (n2, v2)
    assert jnp.allclose(out2, ref2, atol=1e-6), "HBM gather path mismatch"

    print("KERNEL_OK")
</pallas_src>

<mosaic_0001>
module attributes {stable_mosaic.version = 11 : i64} {
  func.func @_onehot_matmul_kernel(%arg0: i32, %arg1: memref<8x1xi32, #tpu.memory_space<vmem>>, %arg2: memref<16x128xf32, #tpu.memory_space<vmem>>, %arg3: memref<8x128xf32, #tpu.memory_space<vmem>>) attributes {dimension_semantics = [#tpu.dimension_semantics<parallel>], iteration_bounds = array<i64: 1>, scalar_prefetch = 0 : i64, scratch_operands = 0 : i64, tpu.core_type = #tpu.core_type<tc>, window_params = [{transform_indices = @transform_0, window_bounds = array<i64: 8, 1>}, {pipeline_mode = #tpu.pipeline_mode<synchronous>, transform_indices = @transform_1, window_bounds = array<i64: 16, 128>}, {transform_indices = @transform_2, window_bounds = array<i64: 8, 128>}]} {
    %c0 = arith.constant 0 : index
    %c0_0 = arith.constant 0 : index
    %0 = vector.load %arg1[%c0, %c0_0] : memref<8x1xi32, #tpu.memory_space<vmem>>, vector<8x1xi32>
    %1 = tpu.iota {dimensions = array<i32: 1>} : vector<8x16xi32>
    %2 = vector.broadcast %0 : vector<8x1xi32> to vector<8x16xi32>
    %3 = arith.cmpi eq, %1, %2 : vector<8x16xi32>
    %4 = arith.extui %3 : vector<8x16xi1> to vector<8x16xi32>
    %5 = arith.sitofp %4 : vector<8x16xi32> to vector<8x16xf32>
    %c0_1 = arith.constant 0 : index
    %c0_2 = arith.constant 0 : index
    %6 = vector.load %arg2[%c0_1, %c0_2] : memref<16x128xf32, #tpu.memory_space<vmem>>, vector<16x128xf32>
    %cst = arith.constant dense<0.000000e+00> : vector<8x128xf32>
    %7 = tpu.matmul %5, %6, %cst {dimension_numbers = #tpu.dot_dimension_numbers<[1], [0], [0], [1], [0, 0, 1, 1], [], []>} : vector<8x16xf32>, vector<16x128xf32>, vector<8x128xf32> -> vector<8x128xf32>
    %c0_3 = arith.constant 0 : index
    %c0_4 = arith.constant 0 : index
    %8 = vector.load %arg3[%c0_3, %c0_4] : memref<8x128xf32, #tpu.memory_space<vmem>>, vector<8x128xf32>
    tpu.vector_store %arg3[%c0_3, %c0_4], %7 {strides = array<i32>} : memref<8x128xf32, #tpu.memory_space<vmem>>, vector<8x128xf32>,
    return
  }
  func.func @transform_0(%arg0: i32) -> (i32, i32) {
    %c0_i32 = arith.constant 0 : i32
    %c0_i32_0 = arith.constant 0 : i32
    return %arg0, %c0_i32 : i32, i32
  }
  func.func @transform_1(%arg0: i32) -> (i32, i32) {
    %c0_i32 = arith.constant 0 : i32
    %c0_i32_0 = arith.constant 0 : i32
    %c0_i32_1 = arith.constant 0 : i32
    return %c0_i32, %c0_i32_0 : i32, i32
  }
  func.func @transform_2(%arg0: i32) -> (i32, i32) {
    %c0_i32 = arith.constant 0 : i32
    %c0_i32_0 = arith.constant 0 : i32
    return %arg0, %c0_i32 : i32, i32
  }
}

</mosaic_0001>

<llo_original>
// kernel: tpu_custom_call.1
$region0: #{tpu_custom_call.1}
  #allocation0 [shape = 'u32[]', space=smem, size = 0x4, offset = 0x4, fixed_abs, tag = 'smem constant byte address 0x4 - core index']
  #allocation1 [shape = 'u32[72,128]{1,0:T(1,128)}', space=vmem, size = 0x9000, scoped, tag = 'internal scratch']
  %s0 = inlined_call_operand.vmem [shape: s32[8,1], index: 0, kind: input, shape index: {}]
  %s1 = inlined_call_operand.hbm [shape: f32[16,128], index: 1, kind: input, shape index: {}]
  %s2 = inlined_call_operand.hbm [shape: f32[8,128], index: 2, kind: output, shape index: {}]
  %s3 = sld [smem:[#allocation0]]
  $region22: #{tpu_custom_call.1} parent=0
    _
  %s5 = ssub.s32 1, %s3
  %s6 = scalar_select 0, %s5, %s3
  $region1: #{tpu_custom_call.1} parent=0
    #allocation2 [shape = 'u8[8192]{0}', space=vmem, size = 0x2000, scoped, tag = 'input window, operand 1, single buffered']
    #allocation3 [shape = 's32[1]{0}', space=sflag, size = 0x4, scoped, tag = 'scoped memory for tpu_custom_call.1']
    #allocation4 [shape = 's32[1]{0}', space=sflag, size = 0x4, scoped, tag = 'scoped memory for tpu_custom_call.1']
    #allocation5 [shape = 'u8[4096]{0}', space=vmem, size = 0x1000, scoped, tag = 'output window, operand 0, single buffered']
    %7 = vsyncpa [#allocation3], 0
    %8 = vsyncpa [#allocation4], 0
    // Predicated region
    $region2: #{tpu_custom_call.1} parent=1 // pred_check
      _
    $region3: #{tpu_custom_call.1} parent=1 // pred_check_branch
      %10 = sbr.rel (0) target = $region5
    $region4: #{tpu_custom_call.1} parent=1 // pred_region
      _
    $region5: #{tpu_custom_call.1} parent=1 // pred_fallthru
      _
    // Predicated region
    $region6: #{tpu_custom_call.1} parent=1 // pred_check
      _
    $region7: #{tpu_custom_call.1} parent=1 // pred_check_branch
      %12 = sbr.rel (0) target = $region9
    $region8: #{tpu_custom_call.1} parent=1 // pred_region
      %14 = vsyncadd [#allocation3], 0
      %s15 = sshll.u32 %s1, 4
      %s16 = int_to_ptr.hbm [resolvable:$true] %s15
      %s17 = sshll.u32 [#allocation2], 4
      %s18 = int_to_ptr.vmem [resolvable:$true] %s17
      %23 = dma.hbm_to_vmem [thread:$0]  %s16, 256, %s18, [#allocation3], 128, 128, 8
    $region9: #{tpu_custom_call.1} parent=1 // pred_fallthru
      _
    // Predicated region
    $region10: #{tpu_custom_call.1} parent=1 // pred_check
      _
    $region11: #{tpu_custom_call.1} parent=1 // pred_check_branch
      %25 = sbr.rel (0) target = $region13
    $region12: #{tpu_custom_call.1} parent=1 // pred_region
      %27 = dma.done [#allocation3], 256
    $region13: #{tpu_custom_call.1} parent=1 // pred_fallthru
      _
    %v28 = vld [vmem:[%s0] sm:$0xff]
    %v29 = vlaneseq
    %v30 = vand.u32 %v29, 127
    %31 = vset.pattern.permute.xlu0 0
    %32 = vperm.xlu0 %31, %v28
    %v33 = vpop.permute.xlu0 %32
    %vm34 = vcmp.eq.s32.totalorder %v30, %v33
    %v35 = vsel %vm34, 1, 0
    %v36 = vcvt.s32.f32 %v35
    %v37 = vld [vmem:[#allocation2] sm:$0xff]
    %v38 = vld [vmem:[#allocation2 + $0x8] sm:$0xff]
    %vm39 = vcmask 130048
    %v41 = vsel %vm39, %v36, 0
    %43 = vmatpush.msra.mxu0 0.0
    %44 = vmatpush.msra.mxu0 0.0
    %45 = vmatpush.msra.mxu0 0.0
    %46 = vmatpush.msra.mxu0 0.0
    %47 = vmatpush.msra.mxu0 0.0
    %48 = vmatpush.msra.mxu0 0.0
    %49 = vmatpush.msra.mxu0 0.0
    %50 = vmatpush.msra.mxu0 0.0
    %51 = vmatpush.msra.mxu0 0.0
    %52 = vmatpush.msra.mxu0 0.0
    %53 = vmatpush.msra.mxu0 0.0
    %54 = vmatpush.msra.mxu0 0.0
    %55 = vmatpush.msra.mxu0 0.0
    %56 = vmatpush.msra.mxu0 0.0
    %57 = vmatpush.msra.mxu0 %v38
    %58 = vmatpush.msra.mxu0 %v37
    %59 = vmatmul.f32.gmra.mxu0 %v41
    %v60 = vpop.f32.mrf.mxu0
    %v61 = vadd.f32 0.0, %v60
    %62 = vdwg.mxu0
    %63 = vst [vmem:[#allocation5] sm:$0xff] %v61
    // Predicated region
    $region14: #{tpu_custom_call.1} parent=1 // pred_check
      _
    $region15: #{tpu_custom_call.1} parent=1 // pred_check_branch
      %65 = sbr.rel (0) target = $region17
    $region16: #{tpu_custom_call.1} parent=1 // pred_region
      %67 = vsyncadd [#allocation4], 0
      %s69 = sshll.u32 [#allocation5], 4
      %s70 = int_to_ptr.vmem [resolvable:$true] %s69
      %s71 = sshll.u32 %s2, 4
      %s72 = int_to_ptr.hbm [resolvable:$true] %s71
      %74 = dma.vmem_to_hbm [thread:$0]  %s70, 128, %s72, [#allocation4]
    $region17: #{tpu_custom_call.1} parent=1 // pred_fallthru
      _
    // Predicated region
    $region18: #{tpu_custom_call.1} parent=1 // pred_check
      _
    $region19: #{tpu_custom_call.1} parent=1 // pred_check_branch
      %76 = sbr.rel (0) target = $region21
    $region20: #{tpu_custom_call.1} parent=1 // pred_region
      %78 = dma.done [#allocation4], 128
    $region21: #{tpu_custom_call.1} parent=1 // pred_fallthru
      _
    %79 = vsyncpa [#allocation3], 1
    %80 = vsyncpa [#allocation4], 1

</llo_original>
